<compile_context>
chip_gen: v7x
topology: tpu7x:2x2x1
jax: 0.10.0
libtpu: 0.0.40
codegen_flags: <defaults>
</compile_context>

<pallas_src>
import functools

import jax
import jax.numpy as jnp
from jax.experimental import pallas as pl
from jax.experimental.pallas import tpu as pltpu


def _round_up(x, m):
    return (x + m - 1) // m * m


def _pick_tb(batch):
    """Batch tile: big tiles to amortize ~0.35us/step, >=4 grid steps when the
    batch allows it (keeps both v7x TensorCores busy), low padding waste."""
    for tb in (2048, 1024, 512, 256, 128):
        if batch >= 4 * tb:
            return tb
    if batch > 128:
        return 128
    return _round_up(max(batch, 1), 8)


def _make_kernel(offsets):
    """offsets[t] = start row of table t inside the folded table (static)."""
    offsets = tuple(int(o) for o in offsets)

    def kernel(idx_ref, folded_ref, b1_ref, w2_ref, b2_ref, w3_ref, b3_ref,
               o_ref):
        # idx_ref:    (TB, 5) int32   streamed index tile
        # folded_ref: (V_pad, H) bf16 folded E@W1 tables   -- VMEM-resident
        # b1_ref:     (1, H) f32
        # w2_ref:     (H, H) bf16                          -- VMEM-resident
        # b2_ref:     (1, H) f32
        # w3_ref:     (1, H) f32 (linear_out weight as a row)
        # b3_ref:     (1, 1) f32
        # o_ref:      (TB, 1) f32
        tb = idx_ref.shape[0]
        v_pad = folded_ref.shape[0]

        idx = idx_ref[...]                                      # (TB, 5) int32
        lane = jax.lax.broadcasted_iota(jnp.int32, (tb, v_pad), 1)

        # Multi-hot over the concatenated (disjoint) vocab ranges; accumulate
        # in f32 (v5e VPU has no bf16), cast once for the MXU.
        onehot = jnp.zeros((tb, v_pad), jnp.float32)
        for t, off in enumerate(offsets):
            onehot = onehot + (lane == (idx[:, t:t + 1] + off)).astype(
                jnp.float32)

        # Fused gather + layer 1: multi-hot @ (E @ W1) + b1, ReLU.
        h1 = jnp.dot(onehot.astype(jnp.bfloat16), folded_ref[...],
                     preferred_element_type=jnp.float32) + b1_ref[...]
        h1 = jnp.maximum(h1, 0.0)
        # Dropout(p=0.5) is identity at inference time (eval mode).

        # Layer 2 (256 -> 256) on the MXU, bf16 operands, f32 accumulation.
        h2 = jnp.dot(h1.astype(jnp.bfloat16), w2_ref[...],
                     preferred_element_type=jnp.float32) + b2_ref[...]
        h2 = jnp.maximum(h2, 0.0)

        # Final 256 -> 1 projection on VPU (mul) + XLU (lane reduction).
        out = jnp.sum(h2 * w3_ref[...], axis=-1, keepdims=True) + b3_ref[...]
        o_ref[...] = out.astype(o_ref.dtype)

    return kernel


@jax.jit
def embedding_regression_forward(x_idx, params):
    """x_idx: int32 (B, 5). Returns float32 (B, 1)."""
    (cell_emb, assay_emb, p25_emb, p250_emb, p5k_emb,
     w1, b1, w2, b2, w3, b3) = params

    tables = (cell_emb, assay_emb, p25_emb, p250_emb, p5k_emb)
    vocabs = [int(t.shape[0]) for t in tables]
    dims = [int(t.shape[1]) for t in tables]
    H = int(w1.shape[1])

    offsets = [0]
    for v in vocabs[:-1]:
        offsets.append(offsets[-1] + v)
    v_total = sum(vocabs)
    v_pad = _round_up(v_total, 128)

    # --- host-side fold: per-table  E_t @ W1[d_t : d_t + D_t, :]  (tiny). ---
    folded_parts = []
    d_start = 0
    for tab, d in zip(tables, dims):
        folded_parts.append(jnp.dot(tab, w1[d_start:d_start + d, :]))
        d_start += d
    folded = jnp.concatenate(folded_parts, axis=0)          # (V_total, H) f32
    folded = jnp.pad(folded, ((0, v_pad - v_total), (0, 0)))
    folded = folded.astype(jnp.bfloat16)                     # (V_pad, H) bf16

    w2_bf = w2.astype(jnp.bfloat16)
    w3_row = jnp.reshape(w3, (1, H)).astype(jnp.float32)     # (256,1) -> (1,256)
    b3_r = jnp.reshape(b3, (1, 1)).astype(jnp.float32)

    # --- batch tiling ---
    B, NF = x_idx.shape
    TB = _pick_tb(B)
    B_pad = _round_up(B, TB)
    G = B_pad // TB
    idx_p = jnp.pad(x_idx.astype(jnp.int32), ((0, B_pad - B), (0, 0)))

    flops = 2 * B_pad * (v_pad * H + H * H + H)
    bytes_accessed = (4 * idx_p.size + 2 * folded.size + 2 * w2_bf.size
                      + 4 * (3 * H + 1) + 4 * B_pad)

    out = pl.pallas_call(
        _make_kernel(offsets),
        out_shape=jax.ShapeDtypeStruct((B_pad, 1), jnp.float32),
        grid=(G,),
        in_specs=[
            pl.BlockSpec((TB, NF), lambda i: (i, 0)),     # streamed indices
            pl.BlockSpec((v_pad, H), lambda i: (0, 0)),   # resident folded E@W1
            pl.BlockSpec((1, H), lambda i: (0, 0)),       # b1
            pl.BlockSpec((H, H), lambda i: (0, 0)),       # w2 (bf16)
            pl.BlockSpec((1, H), lambda i: (0, 0)),       # b2
            pl.BlockSpec((1, H), lambda i: (0, 0)),       # w3 row
            pl.BlockSpec((1, 1), lambda i: (0, 0)),       # b3
        ],
        out_specs=pl.BlockSpec((TB, 1), lambda i: (i, 0)),
        compiler_params=pltpu.CompilerParams(
            dimension_semantics=("parallel",)),
        cost_estimate=pl.CostEstimate(
            flops=flops, transcendentals=0, bytes_accessed=bytes_accessed),
    )(idx_p, folded, b1, w2_bf, b2, w3_row, b3_r)
    return out[:B]


def init_params(key,
                n_cells, n_assays, n_pos_25bp, n_pos_250bp, n_pos_5kbp,
                cell_dim=10, assay_dim=10, p25_dim=25, p250_dim=25, p5k_dim=25,
                n_hidden=256):
    """Deterministic synthetic parameters matching the PyTorch module shapes."""
    ks = jax.random.split(key, 11)
    in_features = cell_dim + assay_dim + p25_dim + p250_dim + p5k_dim

    def emb(k, n, d):
        return jax.random.normal(k, (n, d), dtype=jnp.float32)

    def linear(kw, kb, fan_in, fan_out):
        bound = 1.0 / jnp.sqrt(fan_in)
        # stored as (in, out): transpose of torch.nn.Linear.weight
        w = jax.random.uniform(kw, (fan_in, fan_out), jnp.float32, -bound, bound)
        b = jax.random.uniform(kb, (1, fan_out), jnp.float32, -bound, bound)
        return w, b

    cell_emb = emb(ks[0], n_cells, cell_dim)
    assay_emb = emb(ks[1], n_assays, assay_dim)
    p25_emb = emb(ks[2], n_pos_25bp, p25_dim)
    p250_emb = emb(ks[3], n_pos_250bp, p250_dim)
    p5k_emb = emb(ks[4], n_pos_5kbp, p5k_dim)
    w1, b1 = linear(ks[5], ks[6], in_features, n_hidden)
    w2, b2 = linear(ks[7], ks[8], n_hidden, n_hidden)
    w3, b3 = linear(ks[9], ks[10], n_hidden, 1)
    return (cell_emb, assay_emb, p25_emb, p250_emb, p5k_emb,
            w1, b1, w2, b2, w3, b3)


def reference_forward(x_idx, params):
    (cell_emb, assay_emb, p25_emb, p250_emb, p5k_emb,
     w1, b1, w2, b2, w3, b3) = params
    inputs = jnp.concatenate(
        (cell_emb[x_idx[:, 0]], assay_emb[x_idx[:, 1]],
         p25_emb[x_idx[:, 2]], p250_emb[x_idx[:, 3]], p5k_emb[x_idx[:, 4]]),
        axis=1)
    h1 = jnp.maximum(inputs @ w1 + b1, 0.0)
    h2 = jnp.maximum(h1 @ w2 + b2, 0.0)
    return h2 @ w3 + b3


if __name__ == "__main__":
    key = jax.random.PRNGKey(0)
    kp, kx1, kx2 = jax.random.split(key, 3)

    # Small synthetic vocab sizes.
    n_cells, n_assays = 6, 4
    n_pos_25bp, n_pos_250bp, n_pos_5kbp = 32, 16, 8

    params = init_params(kp, n_cells, n_assays, n_pos_25bp, n_pos_250bp,
                         n_pos_5kbp)
    maxes = jnp.array([n_cells, n_assays, n_pos_25bp, n_pos_250bp, n_pos_5kbp],
                      dtype=jnp.int32)

    # bf16 matmul operands (f32 accumulation) -> compare at ~1e-2 level.
    TOL = 3e-2

    # --- small-shape check (single grid step) ---
    B = 8
    x_idx = (jax.random.randint(kx1, (B, 5), 0, 2**30, dtype=jnp.int32) % maxes)
    out = jax.block_until_ready(embedding_regression_forward(x_idx, params))
    ref = reference_forward(x_idx, params)
    assert out.shape == (B, 1)
    assert jnp.allclose(out, ref, atol=TOL, rtol=TOL), (out, ref)

    # --- multi-tile check (exercises the streamed / padded grid path) ---
    B2 = 600
    x_idx2 = (jax.random.randint(kx2, (B2, 5), 0, 2**30, dtype=jnp.int32) % maxes)
    out2 = jax.block_until_ready(embedding_regression_forward(x_idx2, params))
    ref2 = reference_forward(x_idx2, params)
    assert out2.shape == (B2, 1)
    assert jnp.allclose(out2, ref2, atol=TOL, rtol=TOL)

    print("KERNEL_OK")
</pallas_src>

<mosaic_0001>
module attributes {stable_mosaic.version = 11 : i64} {
  func.func @kernel(%arg0: i32, %arg1: memref<8x5xi32, #tpu.memory_space<vmem>>, %arg2: memref<128x256xbf16, #tpu.memory_space<vmem>>, %arg3: memref<1x256xf32, #tpu.memory_space<vmem>>, %arg4: memref<256x256xbf16, #tpu.memory_space<vmem>>, %arg5: memref<1x256xf32, #tpu.memory_space<vmem>>, %arg6: memref<1x256xf32, #tpu.memory_space<vmem>>, %arg7: memref<1x1xf32, #tpu.memory_space<vmem>>, %arg8: memref<8x1xf32, #tpu.memory_space<vmem>>) attributes {dimension_semantics = [#tpu.dimension_semantics<parallel>], iteration_bounds = array<i64: 1>, scalar_prefetch = 0 : i64, scratch_operands = 0 : i64, tpu.core_type = #tpu.core_type<tc>, window_params = [{transform_indices = @transform_0, window_bounds = array<i64: 8, 5>}, {pipeline_mode = #tpu.pipeline_mode<synchronous>, transform_indices = @transform_1, window_bounds = array<i64: 128, 256>}, {pipeline_mode = #tpu.pipeline_mode<synchronous>, transform_indices = @transform_2, window_bounds = array<i64: 1, 256>}, {pipeline_mode = #tpu.pipeline_mode<synchronous>, transform_indices = @transform_3, window_bounds = array<i64: 256, 256>}, {pipeline_mode = #tpu.pipeline_mode<synchronous>, transform_indices = @transform_4, window_bounds = array<i64: 1, 256>}, {pipeline_mode = #tpu.pipeline_mode<synchronous>, transform_indices = @transform_5, window_bounds = array<i64: 1, 256>}, {pipeline_mode = #tpu.pipeline_mode<synchronous>, transform_indices = @transform_6, window_bounds = array<i64: 1, 1>}, {transform_indices = @transform_7, window_bounds = array<i64: 8, 1>}]} {
    %c0 = arith.constant 0 : index
    %c0_0 = arith.constant 0 : index
    %0 = vector.load %arg1[%c0, %c0_0] : memref<8x5xi32, #tpu.memory_space<vmem>>, vector<8x5xi32>
    %1 = tpu.iota {dimensions = array<i32: 1>} : vector<8x128xi32>
    %cst = arith.constant 0.000000e+00 : f32
    %2 = vector.broadcast %cst : f32 to vector<8x128xf32>
    %3 = vector.extract_strided_slice %0 {offsets = [0, 0], sizes = [8, 1], strides = [1, 1]} : vector<8x5xi32> to vector<8x1xi32>
    %c0_i32 = arith.constant 0 : i32
    %4 = vector.broadcast %c0_i32 : i32 to vector<8x1xi32>
    %5 = arith.addi %3, %4 : vector<8x1xi32>
    %6 = vector.broadcast %5 : vector<8x1xi32> to vector<8x128xi32>
    %7 = arith.cmpi eq, %1, %6 : vector<8x128xi32>
    %8 = arith.extui %7 : vector<8x128xi1> to vector<8x128xi32>
    %9 = arith.sitofp %8 : vector<8x128xi32> to vector<8x128xf32>
    %10 = arith.addf %2, %9 : vector<8x128xf32>
    %11 = vector.extract_strided_slice %0 {offsets = [0, 1], sizes = [8, 1], strides = [1, 1]} : vector<8x5xi32> to vector<8x1xi32>
    %c6_i32 = arith.constant 6 : i32
    %12 = vector.broadcast %c6_i32 : i32 to vector<8x1xi32>
    %13 = arith.addi %11, %12 : vector<8x1xi32>
    %14 = vector.broadcast %13 : vector<8x1xi32> to vector<8x128xi32>
    %15 = arith.cmpi eq, %1, %14 : vector<8x128xi32>
    %16 = arith.extui %15 : vector<8x128xi1> to vector<8x128xi32>
    %17 = arith.sitofp %16 : vector<8x128xi32> to vector<8x128xf32>
    %18 = arith.addf %10, %17 : vector<8x128xf32>
    %19 = vector.extract_strided_slice %0 {offsets = [0, 2], sizes = [8, 1], strides = [1, 1]} : vector<8x5xi32> to vector<8x1xi32>
    %c10_i32 = arith.constant 10 : i32
    %20 = vector.broadcast %c10_i32 : i32 to vector<8x1xi32>
    %21 = arith.addi %19, %20 : vector<8x1xi32>
    %22 = vector.broadcast %21 : vector<8x1xi32> to vector<8x128xi32>
    %23 = arith.cmpi eq, %1, %22 : vector<8x128xi32>
    %24 = arith.extui %23 : vector<8x128xi1> to vector<8x128xi32>
    %25 = arith.sitofp %24 : vector<8x128xi32> to vector<8x128xf32>
    %26 = arith.addf %18, %25 : vector<8x128xf32>
    %27 = vector.extract_strided_slice %0 {offsets = [0, 3], sizes = [8, 1], strides = [1, 1]} : vector<8x5xi32> to vector<8x1xi32>
    %c42_i32 = arith.constant 42 : i32
    %28 = vector.broadcast %c42_i32 : i32 to vector<8x1xi32>
    %29 = arith.addi %27, %28 : vector<8x1xi32>
    %30 = vector.broadcast %29 : vector<8x1xi32> to vector<8x128xi32>
    %31 = arith.cmpi eq, %1, %30 : vector<8x128xi32>
    %32 = arith.extui %31 : vector<8x128xi1> to vector<8x128xi32>
    %33 = arith.sitofp %32 : vector<8x128xi32> to vector<8x128xf32>
    %34 = arith.addf %26, %33 : vector<8x128xf32>
    %35 = vector.extract_strided_slice %0 {offsets = [0, 4], sizes = [8, 1], strides = [1, 1]} : vector<8x5xi32> to vector<8x1xi32>
    %c58_i32 = arith.constant 58 : i32
    %36 = vector.broadcast %c58_i32 : i32 to vector<8x1xi32>
    %37 = arith.addi %35, %36 : vector<8x1xi32>
    %38 = vector.broadcast %37 : vector<8x1xi32> to vector<8x128xi32>
    %39 = arith.cmpi eq, %1, %38 : vector<8x128xi32>
    %40 = arith.extui %39 : vector<8x128xi1> to vector<8x128xi32>
    %41 = arith.sitofp %40 : vector<8x128xi32> to vector<8x128xf32>
    %42 = arith.addf %34, %41 : vector<8x128xf32>
    %43 = arith.truncf %42 : vector<8x128xf32> to vector<8x128xbf16>
    %c0_1 = arith.constant 0 : index
    %c0_2 = arith.constant 0 : index
    %44 = vector.load %arg2[%c0_1, %c0_2] : memref<128x256xbf16, #tpu.memory_space<vmem>>, vector<128x256xbf16>
    %cst_3 = arith.constant dense<0.000000e+00> : vector<8x256xf32>
    %45 = tpu.matmul %43, %44, %cst_3 {dimension_numbers = #tpu.dot_dimension_numbers<[1], [0], [0], [1], [0, 0, 1, 1], [], []>} : vector<8x128xbf16>, vector<128x256xbf16>, vector<8x256xf32> -> vector<8x256xf32>
    %c0_4 = arith.constant 0 : index
    %c0_5 = arith.constant 0 : index
    %46 = vector.load %arg3[%c0_4, %c0_5] : memref<1x256xf32, #tpu.memory_space<vmem>>, vector<1x256xf32>
    %47 = vector.broadcast %46 : vector<1x256xf32> to vector<8x256xf32>
    %48 = arith.addf %45, %47 : vector<8x256xf32>
    %cst_6 = arith.constant 0.000000e+00 : f32
    %49 = vector.broadcast %cst_6 : f32 to vector<8x256xf32>
    %50 = arith.maximumf %48, %49 : vector<8x256xf32>
    %51 = arith.truncf %50 : vector<8x256xf32> to vector<8x256xbf16>
    %c0_7 = arith.constant 0 : index
    %c0_8 = arith.constant 0 : index
    %52 = vector.load %arg4[%c0_7, %c0_8] : memref<256x256xbf16, #tpu.memory_space<vmem>>, vector<256x256xbf16>
    %cst_9 = arith.constant dense<0.000000e+00> : vector<8x256xf32>
    %53 = tpu.matmul %51, %52, %cst_9 {dimension_numbers = #tpu.dot_dimension_numbers<[1], [0], [0], [1], [0, 0, 1, 1], [], []>} : vector<8x256xbf16>, vector<256x256xbf16>, vector<8x256xf32> -> vector<8x256xf32>
    %c0_10 = arith.constant 0 : index
    %c0_11 = arith.constant 0 : index
    %54 = vector.load %arg5[%c0_10, %c0_11] : memref<1x256xf32, #tpu.memory_space<vmem>>, vector<1x256xf32>
    %55 = vector.broadcast %54 : vector<1x256xf32> to vector<8x256xf32>
    %56 = arith.addf %53, %55 : vector<8x256xf32>
    %cst_12 = arith.constant 0.000000e+00 : f32
    %57 = vector.broadcast %cst_12 : f32 to vector<8x256xf32>
    %58 = arith.maximumf %56, %57 : vector<8x256xf32>
    %c0_13 = arith.constant 0 : index
    %c0_14 = arith.constant 0 : index
    %59 = vector.load %arg6[%c0_13, %c0_14] : memref<1x256xf32, #tpu.memory_space<vmem>>, vector<1x256xf32>
    %60 = vector.broadcast %59 : vector<1x256xf32> to vector<8x256xf32>
    %61 = arith.mulf %58, %60 : vector<8x256xf32>
    %cst_15 = arith.constant dense<0.000000e+00> : vector<8xf32>
    %62 = vector.multi_reduction <add>, %61, %cst_15 [1] : vector<8x256xf32> to vector<8xf32>
    %63 = vector.shape_cast %62 : vector<8xf32> to vector<8x1xf32>
    %c0_16 = arith.constant 0 : index
    %c0_17 = arith.constant 0 : index
    %64 = vector.load %arg7[%c0_16, %c0_17] : memref<1x1xf32, #tpu.memory_space<vmem>>, vector<1x1xf32>
    %65 = vector.broadcast %64 : vector<1x1xf32> to vector<8x1xf32>
    %66 = arith.addf %63, %65 : vector<8x1xf32>
    %c0_18 = arith.constant 0 : index
    %c0_19 = arith.constant 0 : index
    %67 = vector.load %arg8[%c0_18, %c0_19] : memref<8x1xf32, #tpu.memory_space<vmem>>, vector<8x1xf32>
    tpu.vector_store %arg8[%c0_18, %c0_19], %66 {strides = array<i32>} : memref<8x1xf32, #tpu.memory_space<vmem>>, vector<8x1xf32>,
    return
  }
  func.func @transform_0(%arg0: i32) -> (i32, i32) {
    %c0_i32 = arith.constant 0 : i32
    %c0_i32_0 = arith.constant 0 : i32
    return %arg0, %c0_i32 : i32, i32
  }
  func.func @transform_1(%arg0: i32) -> (i32, i32) {
    %c0_i32 = arith.constant 0 : i32
    %c0_i32_0 = arith.constant 0 : i32
    %c0_i32_1 = arith.constant 0 : i32
    return %c0_i32, %c0_i32_0 : i32, i32
  }
  func.func @transform_2(%arg0: i32) -> (i32, i32) {
    %c0_i32 = arith.constant 0 : i32
    %c0_i32_0 = arith.constant 0 : i32
    %c0_i32_1 = arith.constant 0 : i32
    return %c0_i32, %c0_i32_0 : i32, i32
  }
  func.func @transform_3(%arg0: i32) -> (i32, i32) {
    %c0_i32 = arith.constant 0 : i32
    %c0_i32_0 = arith.constant 0 : i32
    %c0_i32_1 = arith.constant 0 : i32
    return %c0_i32, %c0_i32_0 : i32, i32
  }
  func.func @transform_4(%arg0: i32) -> (i32, i32) {
    %c0_i32 = arith.constant 0 : i32
    %c0_i32_0 = arith.constant 0 : i32
    %c0_i32_1 = arith.constant 0 : i32
    return %c0_i32, %c0_i32_0 : i32, i32
  }
  func.func @transform_5(%arg0: i32) -> (i32, i32) {
    %c0_i32 = arith.constant 0 : i32
    %c0_i32_0 = arith.constant 0 : i32
    %c0_i32_1 = arith.constant 0 : i32
    return %c0_i32, %c0_i32_0 : i32, i32
  }
  func.func @transform_6(%arg0: i32) -> (i32, i32) {
    %c0_i32 = arith.constant 0 : i32
    %c0_i32_0 = arith.constant 0 : i32
    %c0_i32_1 = arith.constant 0 : i32
    return %c0_i32, %c0_i32_0 : i32, i32
  }
  func.func @transform_7(%arg0: i32) -> (i32, i32) {
    %c0_i32 = arith.constant 0 : i32
    %c0_i32_0 = arith.constant 0 : i32
    return %arg0, %c0_i32 : i32, i32
  }
}

</mosaic_0001>

<llo_original>
// kernel: embedding_regression_forward.1
$region0: #{embedding_regression_forward.1}
  #allocation0 [shape = 'u32[]', space=smem, size = 0x4, offset = 0x4, fixed_abs, tag = 'smem constant byte address 0x4 - core index']
  #allocation1 [shape = 'u32[144,128]{1,0:T(1,128)}', space=vmem, size = 0x12000, scoped, tag = 'internal scratch']
  #allocation2 [shape = 'f32[1,1]{1,0:T(1,128)S(1)}', space=vmem, size = 0x200, scoped, tag = 'scoped memory for embedding_regression_forward.1']
  %s0 = inlined_call_operand.vmem [shape: s32[8,5], index: 0, kind: input, shape index: {}]
  %s1 = inlined_call_operand.vmem [shape: bf16[128,256], index: 1, kind: input, shape index: {}]
  %s2 = inlined_call_operand.vmem [shape: f32[1,256], index: 2, kind: input, shape index: {}]
  %s3 = inlined_call_operand.vmem [shape: bf16[256,256], index: 3, kind: input, shape index: {}]
  %s4 = inlined_call_operand.vmem [shape: f32[1,256], index: 4, kind: input, shape index: {}]
  %s5 = inlined_call_operand.vmem [shape: f32[1,256], index: 5, kind: input, shape index: {}]
  %s6 = inlined_call_operand.<no memory space> [shape: f32[1,1], index: 6, kind: input, shape index: {}]
  %s7 = inlined_call_operand.vmem [shape: f32[8,1], index: 7, kind: output, shape index: {}]
  %s8 = sld [smem:[#allocation0]]
  $region38: #{embedding_regression_forward.1} parent=0
    _
  %s10 = ssub.s32 1, %s8
  %s11 = scalar_select 0, %s10, %s8
  %v12 = vstv %s6
  %13 = vst [vmem:[#allocation2] sm:$0x1] %v12
  // Predicated region
  $region2: #{embedding_regression_forward.1} parent=0 // pred_check
    _
  $region3: #{embedding_regression_forward.1} parent=0 // pred_check_branch
    %15 = sbr.rel (0) target = $region5
  $region4: #{embedding_regression_forward.1} parent=0 // pred_region
    _
  $region5: #{embedding_regression_forward.1} parent=0 // pred_fallthru
    _
  // Predicated region
  $region6: #{embedding_regression_forward.1} parent=0 // pred_check
    _
  $region7: #{embedding_regression_forward.1} parent=0 // pred_check_branch
    %17 = sbr.rel (0) target = $region9
  $region8: #{embedding_regression_forward.1} parent=0 // pred_region
    _
  $region9: #{embedding_regression_forward.1} parent=0 // pred_fallthru
    _
  // Predicated region
  $region10: #{embedding_regression_forward.1} parent=0 // pred_check
    _
  $region11: #{embedding_regression_forward.1} parent=0 // pred_check_branch
    %19 = sbr.rel (0) target = $region13
  $region12: #{embedding_regression_forward.1} parent=0 // pred_region
    _
  $region13: #{embedding_regression_forward.1} parent=0 // pred_fallthru
    _
  // Predicated region
  $region14: #{embedding_regression_forward.1} parent=0 // pred_check
    _
  $region15: #{embedding_regression_forward.1} parent=0 // pred_check_branch
    %21 = sbr.rel (0) target = $region17
  $region16: #{embedding_regression_forward.1} parent=0 // pred_region
    _
  $region17: #{embedding_regression_forward.1} parent=0 // pred_fallthru
    _
  // Predicated region
  $region18: #{embedding_regression_forward.1} parent=0 // pred_check
    _
  $region19: #{embedding_regression_forward.1} parent=0 // pred_check_branch
    %23 = sbr.rel (0) target = $region21
  $region20: #{embedding_regression_forward.1} parent=0 // pred_region
    _
  $region21: #{embedding_regression_forward.1} parent=0 // pred_fallthru
    _
  // Predicated region
  $region22: #{embedding_regression_forward.1} parent=0 // pred_check
    _
  $region23: #{embedding_regression_forward.1} parent=0 // pred_check_branch
    %25 = sbr.rel (0) target = $region25
  $region24: #{embedding_regression_forward.1} parent=0 // pred_region
    _
  $region25: #{embedding_regression_forward.1} parent=0 // pred_fallthru
    _
  // Predicated region
  $region26: #{embedding_regression_forward.1} parent=0 // pred_check
    _
  $region27: #{embedding_regression_forward.1} parent=0 // pred_check_branch
    %27 = sbr.rel (0) target = $region29
  $region28: #{embedding_regression_forward.1} parent=0 // pred_region
    _
  $region29: #{embedding_regression_forward.1} parent=0 // pred_fallthru
    _
  %v29 = vld [vmem:[%s0] sm:$0xff]
  %v30 = vlaneseq
  %v31 = vand.u32 %v30, 127
  %32 = vset.pattern.permute.xlu0 0
  %33 = vperm.xlu0 %32, %v29
  %v34 = vpop.permute.xlu0 %33
  %vm35 = vcmp.eq.s32.totalorder %v31, %v34
  %v36 = vsel %vm35, 1, 0
  %v37 = vcvt.s32.f32 %v36
  %v38 = vadd.f32 %v37, 0.0
  %v39 = vadd.s32 %v29, 6
  %40 = vset.pattern.permute.xlu0 1
  %41 = vperm.xlu0 %40, %v39
  %v42 = vpop.permute.xlu0 %41
  %vm43 = vcmp.eq.s32.totalorder %v31, %v42
  %v44 = vsel %vm43, 1, 0
  %v45 = vcvt.s32.f32 %v44
  %v46 = vadd.f32 %v38, %v45
  %v47 = vadd.s32 %v29, 10
  %48 = vset.pattern.permute.xlu0 2
  %49 = vperm.xlu0 %48, %v47
  %v50 = vpop.permute.xlu0 %49
  %vm51 = vcmp.eq.s32.totalorder %v31, %v50
  %v52 = vsel %vm51, 1, 0
  %v53 = vcvt.s32.f32 %v52
  %v54 = vadd.f32 %v46, %v53
  %v55 = vadd.s32 %v29, 42
  %56 = vset.pattern.permute.xlu0 3
  %57 = vperm.xlu0 %56, %v55
  %v58 = vpop.permute.xlu0 %57
  %vm59 = vcmp.eq.s32.totalorder %v31, %v58
  %v60 = vsel %vm59, 1, 0
  %v61 = vcvt.s32.f32 %v60
  %v62 = vadd.f32 %v54, %v61
  %v63 = vadd.s32 %v29, 58
  %64 = vset.pattern.permute.xlu0 4
  %65 = vperm.xlu0 %64, %v63
  %v66 = vpop.permute.xlu0 %65
  %vm67 = vcmp.eq.s32.totalorder %v31, %v66
  %v68 = vsel %vm67, 1, 0
  %v69 = vcvt.s32.f32 %v68
  %v70 = vadd.f32 %v62, %v69
  %v71 = vpack.c.bf16 %v70, %v70
  %v72 = vld [vmem:[%s1] sm:$0xff]
  %v73 = vld [vmem:[%s1 + $0x8] sm:$0xff]
  %v74 = vld [vmem:[%s1 + $0x10] sm:$0xff]
  %v75 = vld [vmem:[%s1 + $0x18] sm:$0xff]
  %v76 = vld [vmem:[%s1 + $0x20] sm:$0xff]
  %v77 = vld [vmem:[%s1 + $0x28] sm:$0xff]
  %v78 = vld [vmem:[%s1 + $0x30] sm:$0xff]
  %v79 = vld [vmem:[%s1 + $0x38] sm:$0xff]
  %v80 = vld [vmem:[%s1 + $0x40] sm:$0xff]
  %v81 = vld [vmem:[%s1 + $0x48] sm:$0xff]
  %v82 = vld [vmem:[%s1 + $0x50] sm:$0xff]
  %v83 = vld [vmem:[%s1 + $0x58] sm:$0xff]
  %v84 = vld [vmem:[%s1 + $0x60] sm:$0xff]
  %v85 = vld [vmem:[%s1 + $0x68] sm:$0xff]
  %v86 = vld [vmem:[%s1 + $0x70] sm:$0xff]
  %v87 = vld [vmem:[%s1 + $0x78] sm:$0xff]
  %v88 = vld [vmem:[%s2] sm:$0x3]
  %v90 = vlaneseq
  %v91 = vshrl.u32 %v90, 7
  %v92 = vsub.s32 0, %v91
  %v93 = vrot.slane %v88, %v92
  %v94 = vlaneseq
  %v95 = vshrl.u32 %v94, 7
  %v96 = vsub.s32 1, %v95
  %v97 = vrot.slane %v88, %v96
  %v116 = vunpack.c.l.b16 %v72
  %v117 = vunpack.c.h.b16 %v72
  %v118 = vunpack.c.l.b16 %v73
  %v119 = vunpack.c.h.b16 %v73
  %v120 = vunpack.c.l.b16 %v74
  %v121 = vunpack.c.h.b16 %v74
  %v122 = vunpack.c.l.b16 %v75
  %v123 = vunpack.c.h.b16 %v75
  %v124 = vunpack.c.l.b16 %v76
  %v125 = vunpack.c.h.b16 %v76
  %v126 = vunpack.c.l.b16 %v77
  %v127 = vunpack.c.h.b16 %v77
  %v128 = vunpack.c.l.b16 %v78
  %v129 = vunpack.c.h.b16 %v78
  %v130 = vunpack.c.l.b16 %v79
  %v131 = vunpack.c.h.b16 %v79
  %v132 = vunpack.c.l.b16 %v80
  %v133 = vunpack.c.h.b16 %v80
  %v134 = vunpack.c.l.b16 %v81
  %v135 = vunpack.c.h.b16 %v81
  %v136 = vunpack.c.l.b16 %v82
  %v137 = vunpack.c.h.b16 %v82
  %v138 = vunpack.c.l.b16 %v83
  %v139 = vunpack.c.h.b16 %v83
  %v140 = vunpack.c.l.b16 %v84
  %v141 = vunpack.c.h.b16 %v84
  %v142 = vunpack.c.l.b16 %v85
  %v143 = vunpack.c.h.b16 %v85
  %v144 = vunpack.c.l.b16 %v86
  %v145 = vunpack.c.h.b16 %v86
  %v146 = vunpack.c.l.b16 %v87
  %v147 = vunpack.c.h.b16 %v87
  %v148 = vpack.c.b16 %v118, %v116
  %v149 = vpack.c.b16 %v119, %v117
  %v150 = vpack.c.b16 %v122, %v120
  %v151 = vpack.c.b16 %v123, %v121
  %v152 = vpack.c.b16 %v126, %v124
  %v153 = vpack.c.b16 %v127, %v125
  %v154 = vpack.c.b16 %v130, %v128
  %v155 = vpack.c.b16 %v131, %v129
  %v156 = vpack.c.b16 %v134, %v132
  %v157 = vpack.c.b16 %v135, %v133
  %v158 = vpack.c.b16 %v138, %v136
  %v159 = vpack.c.b16 %v139, %v137
  %v160 = vpack.c.b16 %v142, %v140
  %v161 = vpack.c.b16 %v143, %v141
  %v162 = vpack.c.b16 %v146, %v144
  %v163 = vpack.c.b16 %v147, %v145
  %180 = vmatprep.subr.bf16.mxu0 %v149
  %181 = vmatpush1.bf16.msra.mxu0 %v148
  %182 = vmatprep.subr.bf16.mxu0 %v151
  %183 = vmatpush1.bf16.msra.mxu0 %v150
  %184 = vmatprep.subr.bf16.mxu0 %v153
  %185 = vmatpush1.bf16.msra.mxu0 %v152
  %186 = vmatprep.subr.bf16.mxu0 %v155
  %187 = vmatpush1.bf16.msra.mxu0 %v154
  %188 = vmatprep.subr.bf16.mxu0 %v157
  %189 = vmatpush1.bf16.msra.mxu0 %v156
  %190 = vmatprep.subr.bf16.mxu0 %v159
  %191 = vmatpush1.bf16.msra.mxu0 %v158
  %192 = vmatprep.subr.bf16.mxu0 %v161
  %193 = vmatpush1.bf16.msra.mxu0 %v160
  %194 = vmatprep.subr.bf16.mxu0 %v163
  %195 = vmatpush1.bf16.msra.mxu0 %v162
  %196 = vmatprep.subr.bf16.mxu0 0
  %197 = vmatpush1.bf16.msra.mxu0 0
  %198 = vmatprep.subr.bf16.mxu0 0
  %199 = vmatpush1.bf16.msra.mxu0 0
  %200 = vmatprep.subr.bf16.mxu0 0
  %201 = vmatpush1.bf16.msra.mxu0 0
  %202 = vmatprep.subr.bf16.mxu0 0
  %203 = vmatpush1.bf16.msra.mxu0 0
  %204 = vmatprep.subr.bf16.mxu0 0
  %205 = vmatpush1.bf16.msra.mxu0 0
  %206 = vmatprep.subr.bf16.mxu0 0
  %207 = vmatpush1.bf16.msra.mxu0 0
  %208 = vmatprep.subr.bf16.mxu0 0
  %209 = vmatpush1.bf16.msra.mxu0 0
  %210 = vmatprep.subr.bf16.mxu0 0
  %211 = vmatpush1.bf16.msra.mxu0 0
  %212 = vmatprep.mubr.bf16.mxu0 0
  %213 = vmatmul.mubr.bf16.gmra.mrb[0].mxu0 %v71
  %v214 = vpop.f32.mrb[0].mxu0
  %v215 = vadd.f32 %v93, %v214
  %v216 = vpop.f32.mrb[0].mxu0
  %v217 = vadd.f32 %v97, %v216
  %v218 = vpop.f32.mrb[0].mxu0
  %v219 = vpop.f32.mrb[0].mxu0
  %220 = vdwg.mxu0
  %v221 = vmax.f32 %v215, 0.0
  %v222 = vmax.f32 %v217, 0.0
  %v223 = vpack.c.bf16 %v221, %v221
  %v224 = vpack.c.bf16 %v222, %v222
  %v225 = vld [vmem:[%s3] sm:$0xff]
  %v226 = vld [vmem:[%s3 + $0x8] sm:$0xff]
  %v227 = vld [vmem:[%s3 + $0x10] sm:$0xff]
  %v228 = vld [vmem:[%s3 + $0x18] sm:$0xff]
  %v229 = vld [vmem:[%s3 + $0x20] sm:$0xff]
  %v230 = vld [vmem:[%s3 + $0x28] sm:$0xff]
  %v231 = vld [vmem:[%s3 + $0x30] sm:$0xff]
  %v232 = vld [vmem:[%s3 + $0x38] sm:$0xff]
  %v233 = vld [vmem:[%s3 + $0x40] sm:$0xff]
  %v234 = vld [vmem:[%s3 + $0x48] sm:$0xff]
  %v235 = vld [vmem:[%s3 + $0x50] sm:$0xff]
  %v236 = vld [vmem:[%s3 + $0x58] sm:$0xff]
  %v237 = vld [vmem:[%s3 + $0x60] sm:$0xff]
  %v238 = vld [vmem:[%s3 + $0x68] sm:$0xff]
  %v239 = vld [vmem:[%s3 + $0x70] sm:$0xff]
  %v240 = vld [vmem:[%s3 + $0x78] sm:$0xff]
  %v241 = vld [vmem:[%s3 + $0x80] sm:$0xff]
  %v242 = vld [vmem:[%s3 + $0x88] sm:$0xff]
  %v243 = vld [vmem:[%s3 + $0x90] sm:$0xff]
  %v244 = vld [vmem:[%s3 + $0x98] sm:$0xff]
  %v245 = vld [vmem:[%s3 + $0xa0] sm:$0xff]
  %v246 = vld [vmem:[%s3 + $0xa8] sm:$0xff]
  %v247 = vld [vmem:[%s3 + $0xb0] sm:$0xff]
  %v248 = vld [vmem:[%s3 + $0xb8] sm:$0xff]
  %v249 = vld [vmem:[%s3 + $0xc0] sm:$0xff]
  %v250 = vld [vmem:[%s3 + $0xc8] sm:$0xff]
  %v251 = vld [vmem:[%s3 + $0xd0] sm:$0xff]
  %v252 = vld [vmem:[%s3 + $0xd8] sm:$0xff]
  %v253 = vld [vmem:[%s3 + $0xe0] sm:$0xff]
  %v254 = vld [vmem:[%s3 + $0xe8] sm:$0xff]
  %v255 = vld [vmem:[%s3 + $0xf0] sm:$0xff]
  %v256 = vld [vmem:[%s3 + $0xf8] sm:$0xff]
  %v257 = vld [vmem:[%s4] sm:$0x3]
  %v259 = vlaneseq
  %v260 = vshrl.u32 %v259, 7
  %v261 = vsub.s32 0, %v260
  %v262 = vrot.slane %v257, %v261
  %v263 = vlaneseq
  %v264 = vshrl.u32 %v263, 7
  %v265 = vsub.s32 1, %v264
  %v266 = vrot.slane %v257, %v265
  %v301 = vunpack.c.l.b16 %v225
  %v302 = vunpack.c.h.b16 %v225
  %v303 = vunpack.c.l.b16 %v226
  %v304 = vunpack.c.h.b16 %v226
  %v305 = vunpack.c.l.b16 %v227
  %v306 = vunpack.c.h.b16 %v227
  %v307 = vunpack.c.l.b16 %v228
  %v308 = vunpack.c.h.b16 %v228
  %v309 = vunpack.c.l.b16 %v229
  %v310 = vunpack.c.h.b16 %v229
  %v311 = vunpack.c.l.b16 %v230
  %v312 = vunpack.c.h.b16 %v230
  %v313 = vunpack.c.l.b16 %v231
  %v314 = vunpack.c.h.b16 %v231
  %v315 = vunpack.c.l.b16 %v232
  %v316 = vunpack.c.h.b16 %v232
  %v317 = vunpack.c.l.b16 %v233
  %v318 = vunpack.c.h.b16 %v233
  %v319 = vunpack.c.l.b16 %v234
  %v320 = vunpack.c.h.b16 %v234
  %v321 = vunpack.c.l.b16 %v235
  %v322 = vunpack.c.h.b16 %v235
  %v323 = vunpack.c.l.b16 %v236
  %v324 = vunpack.c.h.b16 %v236
  %v325 = vunpack.c.l.b16 %v237
  %v326 = vunpack.c.h.b16 %v237
  %v327 = vunpack.c.l.b16 %v238
  %v328 = vunpack.c.h.b16 %v238
  %v329 = vunpack.c.l.b16 %v239
  %v330 = vunpack.c.h.b16 %v239
  %v331 = vunpack.c.l.b16 %v240
  %v332 = vunpack.c.h.b16 %v240
  %v333 = vunpack.c.l.b16 %v241
  %v334 = vunpack.c.h.b16 %v241
  %v335 = vunpack.c.l.b16 %v242
  %v336 = vunpack.c.h.b16 %v242
  %v337 = vunpack.c.l.b16 %v243
  %v338 = vunpack.c.h.b16 %v243
  %v339 = vunpack.c.l.b16 %v244
  %v340 = vunpack.c.h.b16 %v244
  %v341 = vunpack.c.l.b16 %v245
  %v342 = vunpack.c.h.b16 %v245
  %v343 = vunpack.c.l.b16 %v246
  %v344 = vunpack.c.h.b16 %v246
  %v345 = vunpack.c.l.b16 %v247
  %v346 = vunpack.c.h.b16 %v247
  %v347 = vunpack.c.l.b16 %v248
  %v348 = vunpack.c.h.b16 %v248
  %v349 = vunpack.c.l.b16 %v249
  %v350 = vunpack.c.h.b16 %v249
  %v351 = vunpack.c.l.b16 %v250
  %v352 = vunpack.c.h.b16 %v250
  %v353 = vunpack.c.l.b16 %v251
  %v354 = vunpack.c.h.b16 %v251
  %v355 = vunpack.c.l.b16 %v252
  %v356 = vunpack.c.h.b16 %v252
  %v357 = vunpack.c.l.b16 %v253
  %v358 = vunpack.c.h.b16 %v253
  %v359 = vunpack.c.l.b16 %v254
  %v360 = vunpack.c.h.b16 %v254
  %v361 = vunpack.c.l.b16 %v255
  %v362 = vunpack.c.h.b16 %v255
  %v363 = vunpack.c.l.b16 %v256
  %v364 = vunpack.c.h.b16 %v256
  %v365 = vpack.c.b16 %v303, %v301
  %v366 = vpack.c.b16 %v304, %v302
  %v367 = vpack.c.b16 %v307, %v305
  %v368 = vpack.c.b16 %v308, %v306
  %v369 = vpack.c.b16 %v311, %v309
  %v370 = vpack.c.b16 %v312, %v310
  %v371 = vpack.c.b16 %v315, %v313
  %v372 = vpack.c.b16 %v316, %v314
  %v373 = vpack.c.b16 %v319, %v317
  %v374 = vpack.c.b16 %v320, %v318
  %v375 = vpack.c.b16 %v323, %v321
  %v376 = vpack.c.b16 %v324, %v322
  %v377 = vpack.c.b16 %v327, %v325
  %v378 = vpack.c.b16 %v328, %v326
  %v379 = vpack.c.b16 %v331, %v329
  %v380 = vpack.c.b16 %v332, %v330
  %v381 = vpack.c.b16 %v335, %v333
  %v382 = vpack.c.b16 %v336, %v334
  %v383 = vpack.c.b16 %v339, %v337
  %v384 = vpack.c.b16 %v340, %v338
  %v385 = vpack.c.b16 %v343, %v341
  %v386 = vpack.c.b16 %v344, %v342
  %v387 = vpack.c.b16 %v347, %v345
  %v388 = vpack.c.b16 %v348, %v346
  %v389 = vpack.c.b16 %v351, %v349
  %v390 = vpack.c.b16 %v352, %v350
  %v391 = vpack.c.b16 %v355, %v353
  %v392 = vpack.c.b16 %v356, %v354
  %v393 = vpack.c.b16 %v359, %v357
  %v394 = vpack.c.b16 %v360, %v358
  %v395 = vpack.c.b16 %v363, %v361
  %v396 = vpack.c.b16 %v364, %v362
  %429 = vmatprep.subr.bf16.mxu0 %v366
  %430 = vmatpush1.bf16.msra.mxu0 %v365
  %431 = vmatprep.subr.bf16.mxu0 %v368
  %432 = vmatpush1.bf16.msra.mxu0 %v367
  %433 = vmatprep.subr.bf16.mxu0 %v370
  %434 = vmatpush1.bf16.msra.mxu0 %v369
  %435 = vmatprep.subr.bf16.mxu0 %v372
  %436 = vmatpush1.bf16.msra.mxu0 %v371
  %437 = vmatprep.subr.bf16.mxu0 %v374
  %438 = vmatpush1.bf16.msra.mxu0 %v373
  %439 = vmatprep.subr.bf16.mxu0 %v376
  %440 = vmatpush1.bf16.msra.mxu0 %v375
  %441 = vmatprep.subr.bf16.mxu0 %v378
  %442 = vmatpush1.bf16.msra.mxu0 %v377
  %443 = vmatprep.subr.bf16.mxu0 %v380
  %444 = vmatpush1.bf16.msra.mxu0 %v379
  %445 = vmatprep.subr.bf16.mxu0 %v382
  %446 = vmatpush1.bf16.msra.mxu0 %v381
  %447 = vmatprep.subr.bf16.mxu0 %v384
  %448 = vmatpush1.bf16.msra.mxu0 %v383
  %449 = vmatprep.subr.bf16.mxu0 %v386
  %450 = vmatpush1.bf16.msra.mxu0 %v385
  %451 = vmatprep.subr.bf16.mxu0 %v388
  %452 = vmatpush1.bf16.msra.mxu0 %v387
  %453 = vmatprep.subr.bf16.mxu0 %v390
  %454 = vmatpush1.bf16.msra.mxu0 %v389
  %455 = vmatprep.subr.bf16.mxu0 %v392
  %456 = vmatpush1.bf16.msra.mxu0 %v391
  %457 = vmatprep.subr.bf16.mxu0 %v394
  %458 = vmatpush1.bf16.msra.mxu0 %v393
  %459 = vmatprep.subr.bf16.mxu0 %v396
  %460 = vmatpush1.bf16.msra.mxu0 %v395
  %461 = vmatprep.mubr.bf16.mxu0 %v224
  %462 = vmatmul.mubr.bf16.gmra.mrb[0].mxu0 %v223
  %v463 = vpop.f32.mrb[0].mxu0
  %v464 = vadd.f32 %v262, %v463
  %v465 = vpop.f32.mrb[0].mxu0
  %v466 = vadd.f32 %v266, %v465
  %v467 = vpop.f32.mrb[0].mxu0
  %v468 = vpop.f32.mrb[0].mxu0
  %469 = vdwg.mxu0
  %v470 = vmax.f32 %v464, 0.0
  %v471 = vmax.f32 %v466, 0.0
  %v472 = vld [vmem:[%s5] sm:$0x3]
  %v474 = vlaneseq
  %v475 = vshrl.u32 %v474, 7
  %v476 = vsub.s32 0, %v475
  %v477 = vrot.slane %v472, %v476
  %v478 = vlaneseq
  %v479 = vshrl.u32 %v478, 7
  %v480 = vsub.s32 1, %v479
  %v481 = vrot.slane %v472, %v480
  %v484 = vmul.f32 %v470, %v477
  %v485 = vmul.f32 %v471, %v481
  %v486 = vadd.f32 %v484, %v485
  %487 = vadd.xlane.f32.xlu0 %v486
  %v488 = vpop.xlane.xlu0 %487
  %v489 = vld [vmem:[#allocation2] sm:$0x1]
  %v491 = vlaneseq
  %v492 = vshrl.u32 %v491, 7
  %v493 = vsub.s32 0, %v492
  %v494 = vrot.slane %v489, %v493
  %v496 = vadd.f32 %v488, %v494
  %vm497 = vcmask 7168
  %498 = vst.msk [vmem:[%s7] sm:$0xff] %vm497, %v496
  // Predicated region
  $region30: #{embedding_regression_forward.1} parent=0 // pred_check
    _
  $region31: #{embedding_regression_forward.1} parent=0 // pred_check_branch
    %500 = sbr.rel (0) target = $region33
  $region32: #{embedding_regression_forward.1} parent=0 // pred_region
    _
  $region33: #{embedding_regression_forward.1} parent=0 // pred_fallthru
    _
  // Predicated region
  $region34: #{embedding_regression_forward.1} parent=0 // pred_check
    _
  $region35: #{embedding_regression_forward.1} parent=0 // pred_check_branch
    %502 = sbr.rel (0) target = $region37
  $region36: #{embedding_regression_forward.1} parent=0 // pred_region
    _
  $region37: #{embedding_regression_forward.1} parent=0 // pred_fallthru
    _

</llo_original>
